<compile_context>
chip_gen: v5e
topology: v5e:2x2
jax: 0.10.0
libtpu: 0.0.40
codegen_flags: <defaults>
</compile_context>

<pallas_src>
import jax
import jax.numpy as jnp
from jax.experimental import pallas as pl
from jax.experimental.pallas import tpu as pltpu

EPS = 1e-5
_LANE = 128
_SUBLANE = 8
_NUM_CORE_SPLITS = 2                     # pass-1 reduction split (v7x dual-TC win)
_VMEM_LIMIT = 32 * 1024 * 1024           # explicit scoped-VMEM limit (safe on all chips)
_TILE_BUDGET = 12 * 1024 * 1024          # bytes for double-buffered (x + out) tiles
_MAX_TILE_ROWS = 2048


def _round_up(a, b):
    return ((a + b - 1) // b) * b


def _pick_tile_rows(m_rows, c_pad):
    # pass-2 VMEM footprint ~= 2 buffers x (x tile + out tile) = 4 * rows * c_pad * 4B
    budget_rows = max(1, _TILE_BUDGET // (4 * c_pad * 4))
    budget_rows = 1 << (budget_rows.bit_length() - 1)        # floor to power of two
    # no point tiling far past the data itself (per core split)
    data_rows = pl.next_power_of_2(max(1, pl.cdiv(m_rows, _NUM_CORE_SPLITS)))
    rows = min(budget_rows, data_rows, _MAX_TILE_ROWS)
    return max(_SUBLANE, rows)            # power of two >= 8 -> multiple of 8


def _stats_kernel(x_ref, sum_ref, sq_ref):
    """Accumulate per-core (8, Cp) partial sums / sums-of-squares over row tiles."""
    @pl.when(pl.program_id(1) == 0)
    def _():
        sum_ref[...] = jnp.zeros_like(sum_ref)
        sq_ref[...] = jnp.zeros_like(sq_ref)

    x = x_ref[...].astype(jnp.float32)                 # (row_blocks, 8, Cp)
    sum_ref[...] += jnp.sum(x, axis=0, keepdims=True)  # (1, 8, Cp) — sublane partials
    sq_ref[...] += jnp.sum(x * x, axis=0, keepdims=True)


def _norm_kernel(x_ref, scale_ref, bias_ref, o_ref):
    """Pure streaming affine: o = x * scale + bias."""
    x = x_ref[...].astype(jnp.float32)
    o_ref[...] = (x * scale_ref[...] + bias_ref[...]).astype(o_ref.dtype)


def graph_batch_norm(x, gamma, beta, *, eps=EPS):
    N, V, C = x.shape
    M = N * V
    Cp = _round_up(C, _LANE)
    tile_rows = _pick_tile_rows(M, Cp)
    Mp = _round_up(M, _NUM_CORE_SPLITS * tile_rows)
    tiles_per_core = Mp // (_NUM_CORE_SPLITS * tile_rows)
    row_blocks = tile_rows // _SUBLANE

    # Zero-pad rows and channels; zeros add nothing to sum / sum-of-squares, so the
    # statistics over the real M rows are exact (count uses the unpadded M).
    x2 = x.reshape(M, C)
    x2 = jnp.pad(x2, ((0, Mp - M), (0, Cp - C)))
    x3 = x2.reshape(Mp // _SUBLANE, _SUBLANE, Cp)      # free row-major reshape

    # ---------------- pass 1: per-channel partial reductions ----------------
    sums, sqs = pl.pallas_call(
        _stats_kernel,
        out_shape=(
            jax.ShapeDtypeStruct((_NUM_CORE_SPLITS, _SUBLANE, Cp), jnp.float32),
            jax.ShapeDtypeStruct((_NUM_CORE_SPLITS, _SUBLANE, Cp), jnp.float32),
        ),
        grid=(_NUM_CORE_SPLITS, tiles_per_core),
        in_specs=[pl.BlockSpec((row_blocks, _SUBLANE, Cp),
                               lambda c, i: (c * tiles_per_core + i, 0, 0))],
        out_specs=(pl.BlockSpec((1, _SUBLANE, Cp), lambda c, i: (c, 0, 0)),
                   pl.BlockSpec((1, _SUBLANE, Cp), lambda c, i: (c, 0, 0))),
        compiler_params=pltpu.CompilerParams(
            dimension_semantics=("parallel", "arbitrary"),
            vmem_limit_bytes=_VMEM_LIMIT),
    )(x3)

    # ------------- tiny XLA epilogue: fold partials -> scale / bias -------------
    count = jnp.float32(M)
    mean = jnp.sum(sums, axis=(0, 1)) / count                       # (Cp,)
    var = jnp.maximum(jnp.sum(sqs, axis=(0, 1)) / count - mean * mean, 0.0)
    g = jnp.pad(gamma.astype(jnp.float32), (0, Cp - C))
    b = jnp.pad(beta.astype(jnp.float32), (0, Cp - C))
    scale = g * jax.lax.rsqrt(var + eps)
    bias = b - mean * scale
    scale2 = scale.reshape(1, Cp)
    bias2 = bias.reshape(1, Cp)

    # ---------------- pass 2: streaming normalize + affine ----------------
    # TODO(synk): for inputs that fit VMEM entirely, a fused single-pass kernel would
    # remove the second HBM read of x (~1.3x); kept two passes for generality.
    out = pl.pallas_call(
        _norm_kernel,
        out_shape=jax.ShapeDtypeStruct((Mp, Cp), x.dtype),
        grid=(Mp // tile_rows,),
        in_specs=[pl.BlockSpec((tile_rows, Cp), lambda i: (i, 0)),
                  pl.BlockSpec((1, Cp), lambda i: (0, 0)),
                  pl.BlockSpec((1, Cp), lambda i: (0, 0))],
        out_specs=pl.BlockSpec((tile_rows, Cp), lambda i: (i, 0)),
        compiler_params=pltpu.CompilerParams(
            dimension_semantics=("parallel",),
            vmem_limit_bytes=_VMEM_LIMIT),
    )(x2, scale2, bias2)

    return out[:M, :C].reshape(N, V, C)


def _reference(x, gamma, beta):
    # Pure-JAX reference of BatchNorm1d training forward on (N, V, C) layout.
    xf = x.astype(jnp.float32)
    mean = jnp.mean(xf, axis=(0, 1), keepdims=True)
    var = jnp.mean((xf - mean) ** 2, axis=(0, 1), keepdims=True)
    return ((xf - mean) * jax.lax.rsqrt(var + EPS) * gamma.reshape(1, 1, -1)
            + beta.reshape(1, 1, -1)).astype(x.dtype)


if __name__ == "__main__":
    N, V, C = 2, 16, 32
    key = jax.random.PRNGKey(0)
    kx, kg, kb = jax.random.split(key, 3)

    x = jax.random.normal(kx, (N, V, C), dtype=jnp.float32)
    # Deterministic, non-trivial affine params (BatchNorm1d weight/bias of shape (C,)).
    gamma = 1.0 + 0.1 * jax.random.normal(kg, (C,), dtype=jnp.float32)
    beta = 0.1 * jax.random.normal(kb, (C,), dtype=jnp.float32)

    out = graph_batch_norm(x, gamma, beta)
    out = jax.block_until_ready(out)

    ref = _reference(x, gamma, beta)
    assert out.shape == (N, V, C)
    assert jnp.max(jnp.abs(out - ref)) < 1e-4, "mismatch vs reference"

    print("KERNEL_OK")
</pallas_src>

<mosaic_0001>
module attributes {stable_mosaic.version = 11 : i64} {
  func.func @_stats_kernel(%arg0: i32, %arg1: i32, %arg2: memref<2x8x128xf32, #tpu.memory_space<vmem>>, %arg3: memref<1x8x128xf32, #tpu.memory_space<vmem>>, %arg4: memref<1x8x128xf32, #tpu.memory_space<vmem>>) attributes {dimension_semantics = [#tpu.dimension_semantics<parallel>, #tpu.dimension_semantics<arbitrary>], iteration_bounds = array<i64: 2, 1>, scalar_prefetch = 0 : i64, scratch_operands = 0 : i64, tpu.core_type = #tpu.core_type<tc>, window_params = [{transform_indices = @transform_0, window_bounds = array<i64: 2, 8, 128>}, {transform_indices = @transform_1, window_bounds = array<i64: 1, 8, 128>}, {transform_indices = @transform_2, window_bounds = array<i64: 1, 8, 128>}]} {
    %c0_i32 = arith.constant 0 : i32
    %0 = arith.cmpi eq, %arg1, %c0_i32 : i32
    %1 = arith.extui %0 : i1 to i32
    %c0_i32_0 = arith.constant 0 : i32
    %2 = arith.cmpi ne, %1, %c0_i32_0 : i32
    scf.if %2 {
      %cst_16 = arith.constant 0.000000e+00 : f32
      %15 = vector.broadcast %cst_16 : f32 to vector<1x8x128xf32>
      %c0_17 = arith.constant 0 : index
      %c0_18 = arith.constant 0 : index
      %c0_19 = arith.constant 0 : index
      %16 = vector.load %arg3[%c0_17, %c0_18, %c0_19] : memref<1x8x128xf32, #tpu.memory_space<vmem>>, vector<1x8x128xf32>
      tpu.vector_store %arg3[%c0_17, %c0_18, %c0_19], %15 {strides = array<i32>} : memref<1x8x128xf32, #tpu.memory_space<vmem>>, vector<1x8x128xf32>,
      %cst_20 = arith.constant 0.000000e+00 : f32
      %17 = vector.broadcast %cst_20 : f32 to vector<1x8x128xf32>
      %c0_21 = arith.constant 0 : index
      %c0_22 = arith.constant 0 : index
      %c0_23 = arith.constant 0 : index
      %18 = vector.load %arg4[%c0_21, %c0_22, %c0_23] : memref<1x8x128xf32, #tpu.memory_space<vmem>>, vector<1x8x128xf32>
      tpu.vector_store %arg4[%c0_21, %c0_22, %c0_23], %17 {strides = array<i32>} : memref<1x8x128xf32, #tpu.memory_space<vmem>>, vector<1x8x128xf32>,
    } else {
    }
    %c0 = arith.constant 0 : index
    %c0_1 = arith.constant 0 : index
    %c0_2 = arith.constant 0 : index
    %3 = vector.load %arg2[%c0, %c0_1, %c0_2] : memref<2x8x128xf32, #tpu.memory_space<vmem>>, vector<2x8x128xf32>
    %c0_3 = arith.constant 0 : index
    %c0_4 = arith.constant 0 : index
    %c0_5 = arith.constant 0 : index
    %4 = vector.load %arg3[%c0_3, %c0_4, %c0_5] : memref<1x8x128xf32, #tpu.memory_space<vmem>>, vector<1x8x128xf32>
    %cst = arith.constant dense<0.000000e+00> : vector<8x128xf32>
    %5 = vector.multi_reduction <add>, %3, %cst [0] : vector<2x8x128xf32> to vector<8x128xf32>
    %6 = vector.shape_cast %5 : vector<8x128xf32> to vector<1x8x128xf32>
    %7 = arith.addf %4, %6 : vector<1x8x128xf32>
    %c0_6 = arith.constant 0 : index
    %c0_7 = arith.constant 0 : index
    %c0_8 = arith.constant 0 : index
    %8 = vector.load %arg3[%c0_6, %c0_7, %c0_8] : memref<1x8x128xf32, #tpu.memory_space<vmem>>, vector<1x8x128xf32>
    tpu.vector_store %arg3[%c0_6, %c0_7, %c0_8], %7 {strides = array<i32>} : memref<1x8x128xf32, #tpu.memory_space<vmem>>, vector<1x8x128xf32>,
    %c0_9 = arith.constant 0 : index
    %c0_10 = arith.constant 0 : index
    %c0_11 = arith.constant 0 : index
    %9 = vector.load %arg4[%c0_9, %c0_10, %c0_11] : memref<1x8x128xf32, #tpu.memory_space<vmem>>, vector<1x8x128xf32>
    %10 = arith.mulf %3, %3 : vector<2x8x128xf32>
    %cst_12 = arith.constant dense<0.000000e+00> : vector<8x128xf32>
    %11 = vector.multi_reduction <add>, %10, %cst_12 [0] : vector<2x8x128xf32> to vector<8x128xf32>
    %12 = vector.shape_cast %11 : vector<8x128xf32> to vector<1x8x128xf32>
    %13 = arith.addf %9, %12 : vector<1x8x128xf32>
    %c0_13 = arith.constant 0 : index
    %c0_14 = arith.constant 0 : index
    %c0_15 = arith.constant 0 : index
    %14 = vector.load %arg4[%c0_13, %c0_14, %c0_15] : memref<1x8x128xf32, #tpu.memory_space<vmem>>, vector<1x8x128xf32>
    tpu.vector_store %arg4[%c0_13, %c0_14, %c0_15], %13 {strides = array<i32>} : memref<1x8x128xf32, #tpu.memory_space<vmem>>, vector<1x8x128xf32>,
    return
  }
  func.func @transform_0(%arg0: i32, %arg1: i32) -> (i32, i32, i32) {
    %c1_i32 = arith.constant 1 : i32
    %0 = arith.muli %arg0, %c1_i32 : i32
    %1 = arith.addi %0, %arg1 : i32
    %c0_i32 = arith.constant 0 : i32
    %c0_i32_0 = arith.constant 0 : i32
    %c0_i32_1 = arith.constant 0 : i32
    return %1, %c0_i32, %c0_i32_0 : i32, i32, i32
  }
  func.func @transform_1(%arg0: i32, %arg1: i32) -> (i32, i32, i32) {
    %c0_i32 = arith.constant 0 : i32
    %c0_i32_0 = arith.constant 0 : i32
    %c0_i32_1 = arith.constant 0 : i32
    return %arg0, %c0_i32, %c0_i32_0 : i32, i32, i32
  }
  func.func @transform_2(%arg0: i32, %arg1: i32) -> (i32, i32, i32) {
    %c0_i32 = arith.constant 0 : i32
    %c0_i32_0 = arith.constant 0 : i32
    %c0_i32_1 = arith.constant 0 : i32
    return %arg0, %c0_i32, %c0_i32_0 : i32, i32, i32
  }
}

</mosaic_0001>

<llo_original>
// kernel: tpu_custom_call.1
$region0: #{tpu_custom_call.1}
  #allocation0 [shape = 'u32[]', space=smem, size = 0x4, offset = 0x4, fixed_abs, tag = 'smem constant byte address 0x4 - core index']
  #allocation1 [shape = 'u32[72,128]{1,0:T(1,128)}', space=vmem, size = 0x9000, scoped, tag = 'internal scratch']
  %s0 = inlined_call_operand.hbm [shape: f32[4,8,128], index: 0, kind: input, shape index: {}]
  %s1 = inlined_call_operand.hbm [shape: f32[2,8,128], index: 1, kind: output, shape index: {0}]
  %s2 = inlined_call_operand.hbm [shape: f32[2,8,128], index: 2, kind: output, shape index: {1}]
  %3 = xla_tuple %s1, %s2
  %s4 = sld [smem:[#allocation0]]
  $region53: #{tpu_custom_call.1} parent=0
    _
  %s6 = ssub.s32 1, %s4
  %s7 = scalar_select 0, %s6, %s4
  $region1: #{tpu_custom_call.1} parent=0
    #allocation2 [shape = 'u8[16384]{0}', space=vmem, size = 0x4000, scoped, tag = 'input window, operand 0']
    #allocation3 [shape = 's32[2]{0}', space=sflag, size = 0x8, scoped, tag = 'scoped memory for tpu_custom_call.1']
    #allocation4 [shape = 's32[2]{0}', space=sflag, size = 0x8, scoped, tag = 'scoped memory for tpu_custom_call.1']
    #allocation5 [shape = 'u8[8192]{0}', space=vmem, size = 0x2000, scoped, tag = 'output window, operand 0']
    #allocation6 [shape = 'u8[8192]{0}', space=vmem, size = 0x2000, scoped, tag = 'output window, operand 1']
    #allocation7 [shape = 's32[2]{0}', space=sflag, size = 0x8, scoped, tag = 'scoped memory for tpu_custom_call.1']
    %8 = vsyncpa [#allocation3], 0
    %s9 = scalar_lea.sflag [#allocation3], 1
    %10 = vsyncpa %s9, 0
    %11 = vsyncpa [#allocation4], 0
    %s12 = scalar_lea.sflag [#allocation4], 1
    %13 = vsyncpa %s12, 0
    %14 = vsyncpa [#allocation7], 0
    %s15 = scalar_lea.sflag [#allocation7], 1
    %16 = vsyncpa %s15, 0
    loop: start=0, step=1, limit=4
    $region2: #{tpu_custom_call.1} parent=1 // loop_pre_header
      _
    $region3: #{tpu_custom_call.1} parent=1 // loop_header
      %s18 = sphi 0, %s22
      %p19 = scmp.ge.s32.totalorder %s18, 4
      %s25 = sphi 0, %s37
      %s26 = sphi 0, %s33
      %s27 = sphi 0, %s25
      %s28 = sphi 0, %s26
      %s29 = sphi 0, %s27
      %s30 = sphi 0, %s28
      %s42 = sphi 0, %s44
      %s45 = sphi 0, %s42
      %s46 = sphi 0, %s45
      %s62 = sphi 0, %s46
      %s68 = sphi 0, %s70
      %s71 = sphi 0, %s68
      %s72 = sphi 0, %s71
      %s88 = sphi 0, %s72
      %s94 = sphi 0, %s96
      %s97 = sphi 0, %s94
      %s98 = sphi 0, %s97
      %s114 = sphi 0, %s98
    $region4: #{tpu_custom_call.1} parent=1 // loop_header_branch
      %21 = sbr.rel (%p19) target = $region8
    $region5: #{tpu_custom_call.1} parent=1 // loop_body
      %s23 = ssub.s32 %s18, 1
      %s24 = ssub.s32 %s18, 2
      %s31 = sadd.s32 1, %s26
      %p32 = scmp.ge.s32.totalorder %s31, 1
      %s33 = scalar_select %p32, 0, %s31
      %s34 = sadd.s32 1, %s25
      %s35 = scalar_select %p32, %s34, %s25
      %p36 = scmp.ge.s32.totalorder %s35, 2
      %s37 = scalar_select %p36, 0, %s35
      %s38 = sadd.s32 %s25, %s26
      %s39 = sadd.s32 %s37, %s33
      %s40 = ssub.s32 %s38, %s39
      %p41 = scmp.eq.s32.totalorder %s40, 0
      %s43 = sadd.s32 %s42, 1
      %s44 = scalar_select %p41, %s42, %s43
      %p47 = pneg %p41
      %p48 = scmp.eq.s32.totalorder %s18, 1
      %p49 = por %p47, %p48
      %p50 = scmp.ne.s32.totalorder %s42, %s45
      %p51 = scmp.eq.s32.totalorder %s18, 0
      %p52 = por %p50, %p51
      %p53 = scmp.ne.s32.totalorder %s42, %s45
      %p54 = scmp.eq.s32.totalorder %s23, 1
      %p55 = por %p53, %p54
      %p56 = scmp.ne.s32.totalorder %s45, %s46
      %p57 = scmp.eq.s32.totalorder %s23, 0
      %p58 = por %p56, %p57
      %p59 = scmp.ne.s32.totalorder %s45, %s46
      %p60 = scmp.eq.s32.totalorder %s24, 1
      %p61 = por %p59, %p60
      %p63 = scmp.ne.s32.totalorder %s46, %s62
      %p64 = scmp.eq.s32.totalorder %s24, 0
      %p65 = por %p63, %p64
      %s66 = ssub.s32 %s25, %s37
      %p67 = scmp.eq.s32.totalorder %s66, 0
      %s69 = sadd.s32 %s68, 1
      %s70 = scalar_select %p67, %s68, %s69
      %p73 = pneg %p67
      %p74 = scmp.eq.s32.totalorder %s18, 1
      %p75 = por %p73, %p74
      %p76 = scmp.ne.s32.totalorder %s68, %s71
      %p77 = scmp.eq.s32.totalorder %s18, 0
      %p78 = por %p76, %p77
      %p79 = scmp.ne.s32.totalorder %s68, %s71
      %p80 = scmp.eq.s32.totalorder %s23, 1
      %p81 = por %p79, %p80
      %p82 = scmp.ne.s32.totalorder %s71, %s72
      %p83 = scmp.eq.s32.totalorder %s23, 0
      %p84 = por %p82, %p83
      %p85 = scmp.ne.s32.totalorder %s71, %s72
      %p86 = scmp.eq.s32.totalorder %s24, 1
      %p87 = por %p85, %p86
      %p89 = scmp.ne.s32.totalorder %s72, %s88
      %p90 = scmp.eq.s32.totalorder %s24, 0
      %p91 = por %p89, %p90
      %s92 = ssub.s32 %s25, %s37
      %p93 = scmp.eq.s32.totalorder %s92, 0
      %s95 = sadd.s32 %s94, 1
      %s96 = scalar_select %p93, %s94, %s95
      %p99 = pneg %p93
      %p100 = scmp.eq.s32.totalorder %s18, 1
      %p101 = por %p99, %p100
      %p102 = scmp.ne.s32.totalorder %s94, %s97
      %p103 = scmp.eq.s32.totalorder %s18, 0
      %p104 = por %p102, %p103
      %p105 = scmp.ne.s32.totalorder %s94, %s97
      %p106 = scmp.eq.s32.totalorder %s23, 1
      %p107 = por %p105, %p106
      %p108 = scmp.ne.s32.totalorder %s97, %s98
      %p109 = scmp.eq.s32.totalorder %s23, 0
      %p110 = por %p108, %p109
      %p111 = scmp.ne.s32.totalorder %s97, %s98
      %p112 = scmp.eq.s32.totalorder %s24, 1
      %p113 = por %p111, %p112
      %p115 = scmp.ne.s32.totalorder %s98, %s114
      %p116 = scmp.eq.s32.totalorder %s24, 0
      %p117 = por %p115, %p116
      %p118 = scmp.le.s32.totalorder 1, %s18
      %p119 = scmp.lt.s32.totalorder %s18, 3
      %p120 = pnand %p118, %p119
      %p121 = pneg %p120
      // Predicated region
      $region9: #{tpu_custom_call.1} parent=5 // pred_check
        _
      $region10: #{tpu_custom_call.1} parent=5 // pred_check_branch
        %123 = sbr.rel (%p120) target = $region12
      $region11: #{tpu_custom_call.1} parent=5 // pred_region
        %s124 = ssub.s32 %s18, 1
      $region12: #{tpu_custom_call.1} parent=5 // pred_fallthru
        _
      %p125 = scmp.lt.s32.totalorder %s18, 2
      // Predicated region
      $region13: #{tpu_custom_call.1} parent=5 // pred_check
        %p126 = pneg %p125
      $region14: #{tpu_custom_call.1} parent=5 // pred_check_branch
        %128 = sbr.rel (%p126) target = $region16
      $region15: #{tpu_custom_call.1} parent=5 // pred_region
        // Predicated region
        $region17: #{tpu_custom_call.1} parent=15 // pred_check
          %p129 = pneg %p52
        $region18: #{tpu_custom_call.1} parent=15 // pred_check_branch
          %131 = sbr.rel (%p129) target = $region20
        $region19: #{tpu_custom_call.1} parent=15 // pred_region
          %s132 = sand.u32 %s42, 1
          %s133 = scalar_lea.sflag [#allocation3], %s132
          %s134 = sand.u32 %s42, 1
          %s135 = smul.addr %s134, 16
          %s136 = scalar_lea.vmem [#allocation2], %s135
          %s137 = sadd.s32 %s25, %s26
          %s138 = smul.u32 2, %s137
          %140 = vsyncadd %s133, 0
          %s141 = smul.addr %s138, 8
          %s142 = scalar_lea.hbm %s0, %s141
          %s143 = sshll.u32 %s142, 4
          %s144 = int_to_ptr.hbm [resolvable:$true] %s143
          %s145 = sshll.u32 %s136, 4
          %s146 = int_to_ptr.vmem [resolvable:$true] %s145
          %151 = dma.hbm_to_vmem [thread:$0]  %s144, 256, %s146, %s133, 128, 128, 8
        $region20: #{tpu_custom_call.1} parent=15 // pred_fallthru
          _
      $region16: #{tpu_custom_call.1} parent=5 // pred_fallthru
        _
      %p152 = scmp.le.s32.totalorder 1, %s18
      %p153 = scmp.lt.s32.totalorder %s18, 3
      %p154 = pnand %p152, %p153
      %p155 = pneg %p154
      // Predicated region
      $region21: #{tpu_custom_call.1} parent=5 // pred_check
        _
      $region22: #{tpu_custom_call.1} parent=5 // pred_check_branch
        %157 = sbr.rel (%p154) target = $region24
      $region23: #{tpu_custom_call.1} parent=5 // pred_region
        %s158 = ssub.s32 %s18, 1
        %s159 = sand.u32 %s45, 1
        %s160 = scalar_lea.sflag [#allocation3], %s159
        %s161 = sand.u32 %s45, 1
        %s162 = smul.addr %s161, 16
        %s163 = scalar_lea.vmem [#allocation2], %s162
        // Predicated region
        $region25: #{tpu_custom_call.1} parent=23 // pred_check
          %p164 = pneg %p58
        $region26: #{tpu_custom_call.1} parent=23 // pred_check_branch
          %166 = sbr.rel (%p164) target = $region28
        $region27: #{tpu_custom_call.1} parent=23 // pred_region
          %168 = dma.done %s160, 256
        $region28: #{tpu_custom_call.1} parent=23 // pred_fallthru
          _
        %s169 = sand.u32 %s45, 1
        %s170 = scalar_lea.sflag [#allocation3], %s169
        %s171 = sand.u32 %s45, 1
        %s172 = smul.addr %s171, 16
        %s173 = scalar_lea.vmem [#allocation2], %s172
        %p174 = pneg %p58
        %p175 = pneg %p55
        %p176 = pneg %p84
        %p177 = pneg %p81
        %s178 = sand.u32 %s71, 1
        %s179 = scalar_lea.sflag [#allocation4], %s178
        %s180 = sand.u32 %s71, 1
        %s181 = smul.addr %s180, 8
        %s182 = scalar_lea.vmem [#allocation5], %s181
        %p183 = pneg %p110
        %p184 = pneg %p107
        %s185 = sand.u32 %s97, 1
        %s186 = scalar_lea.sflag [#allocation7], %s185
        %s187 = sand.u32 %s97, 1
        %s188 = smul.addr %s187, 8
        %s189 = scalar_lea.vmem [#allocation6], %s188
        %s190 = sadd.s32 %s27, %s28
        %s191 = smul.u32 2, %s190
        %p192 = scmp.eq.s32.totalorder %s28, 0
        // Predicated region
        $region29: #{tpu_custom_call.1} parent=23 // pred_check
          %p193 = pneg %p192
        $region30: #{tpu_custom_call.1} parent=23 // pred_check_branch
          %195 = sbr.rel (%p193) target = $region32
        $region31: #{tpu_custom_call.1} parent=23 // pred_region
          %196 = vst [vmem:[%s182] sm:$0xff] 0.0
          %197 = vst [vmem:[%s189] sm:$0xff] 0.0
        $region32: #{tpu_custom_call.1} parent=23 // pred_fallthru
          _
        %v198 = vld [vmem:[%s163] sm:$0xff]
        %v199 = vld [vmem:[%s163 + $0x8] sm:$0xff]
        %v200 = vld [vmem:[%s182] sm:$0xff]
        %v201 = vadd.f32 %v198, %v199
        %v202 = vadd.f32 %v200, %v201
        %203 = vst [vmem:[%s182] sm:$0xff] %v202
        %v204 = vld [vmem:[%s189] sm:$0xff]
        %v205 = vmul.f32 %v198, %v198
        %v206 = vmul.f32 %v199, %v199
        %v207 = vadd.f32 %v205, %v206
        %v208 = vadd.f32 %v204, %v207
        %209 = vst [vmem:[%s189] sm:$0xff] %v208
        %s210 = sand.u32 %s71, 1
        %s211 = scalar_lea.sflag [#allocation4], %s210
        %s212 = sand.u32 %s71, 1
        %s213 = smul.addr %s212, 8
        %s214 = scalar_lea.vmem [#allocation5], %s213
        %s215 = sand.u32 %s97, 1
        %s216 = scalar_lea.sflag [#allocation7], %s215
        %s217 = sand.u32 %s97, 1
        %s218 = smul.addr %s217, 8
        %s219 = scalar_lea.vmem [#allocation6], %s218
        // Predicated region
        $region33: #{tpu_custom_call.1} parent=23 // pred_check
          %p220 = pneg %p81
        $region34: #{tpu_custom_call.1} parent=23 // pred_check_branch
          %222 = sbr.rel (%p220) target = $region36
        $region35: #{tpu_custom_call.1} parent=23 // pred_region
          %224 = vsyncadd %s211, 0
          %s225 = smul.addr %s27, 8
          %s226 = scalar_lea.hbm %s1, %s225
          %s228 = sshll.u32 %s214, 4
          %s229 = int_to_ptr.vmem [resolvable:$true] %s228
          %s230 = sshll.u32 %s226, 4
          %s231 = int_to_ptr.hbm [resolvable:$true] %s230
          %233 = dma.vmem_to_hbm [thread:$0]  %s229, 128, %s231, %s211
        $region36: #{tpu_custom_call.1} parent=23 // pred_fallthru
          _
        // Predicated region
        $region37: #{tpu_custom_call.1} parent=23 // pred_check
          %p234 = pneg %p107
        $region38: #{tpu_custom_call.1} parent=23 // pred_check_branch
          %236 = sbr.rel (%p234) target = $region40
        $region39: #{tpu_custom_call.1} parent=23 // pred_region
          %238 = vsyncadd %s216, 0
          %s239 = smul.addr %s27, 8
          %s240 = scalar_lea.hbm %s2, %s239
          %s242 = sshll.u32 %s219, 4
          %s243 = int_to_ptr.vmem [resolvable:$true] %s242
          %s244 = sshll.u32 %s240, 4
          %s245 = int_to_ptr.hbm [resolvable:$true] %s244
          %247 = dma.vmem_to_hbm [thread:$0]  %s243, 128, %s245, %s216
        $region40: #{tpu_custom_call.1} parent=23 // pred_fallthru
          _
      $region24: #{tpu_custom_call.1} parent=5 // pred_fallthru
        _
      %p248 = scmp.le.s32.totalorder 2, %s18
      // Predicated region
      $region41: #{tpu_custom_call.1} parent=5 // pred_check
        %p249 = pneg %p248
      $region42: #{tpu_custom_call.1} parent=5 // pred_check_branch
        %251 = sbr.rel (%p249) target = $region44
      $region43: #{tpu_custom_call.1} parent=5 // pred_region
        %s252 = ssub.s32 %s18, 2
        // Predicated region
        $region45: #{tpu_custom_call.1} parent=43 // pred_check
          %p253 = pneg %p87
        $region46: #{tpu_custom_call.1} parent=43 // pred_check_branch
          %255 = sbr.rel (%p253) target = $region48
        $region47: #{tpu_custom_call.1} parent=43 // pred_region
          %s256 = sand.u32 %s72, 1
          %s257 = scalar_lea.sflag [#allocation4], %s256
          %s258 = sand.u32 %s72, 1
          %s259 = smul.addr %s258, 8
          %s260 = scalar_lea.vmem [#allocation5], %s259
          %262 = dma.done %s257, 128
        $region48: #{tpu_custom_call.1} parent=43 // pred_fallthru
          _
        // Predicated region
        $region49: #{tpu_custom_call.1} parent=43 // pred_check
          %p263 = pneg %p113
        $region50: #{tpu_custom_call.1} parent=43 // pred_check_branch
          %265 = sbr.rel (%p263) target = $region52
        $region51: #{tpu_custom_call.1} parent=43 // pred_region
          %s266 = sand.u32 %s98, 1
          %s267 = scalar_lea.sflag [#allocation7], %s266
          %s268 = sand.u32 %s98, 1
          %s269 = smul.addr %s268, 8
          %s270 = scalar_lea.vmem [#allocation6], %s269
          %272 = dma.done %s267, 128
        $region52: #{tpu_custom_call.1} parent=43 // pred_fallthru
          _
      $region44: #{tpu_custom_call.1} parent=5 // pred_fallthru
        _
    $region6: #{tpu_custom_call.1} parent=1 // loop_footer
      %s22 = sadd.s32 1, %s18
    $region7: #{tpu_custom_call.1} parent=1 // loop_footer_branch
      %17 = sbr.rel target = $region3
    $region8: #{tpu_custom_call.1} parent=1 // loop_exit
      _
    %273 = vsyncpa [#allocation3], 1
    %s274 = scalar_lea.sflag [#allocation3], 1
    %275 = vsyncpa %s274, 1
    %276 = vsyncpa [#allocation4], 1
    %s277 = scalar_lea.sflag [#allocation4], 1
    %278 = vsyncpa %s277, 1
    %279 = vsyncpa [#allocation7], 1
    %s280 = scalar_lea.sflag [#allocation7], 1
    %281 = vsyncpa %s280, 1

</llo_original>
